<compile_context>
chip_gen: v7x
topology: tpu7x:2x2x1
jax: 0.10.0
libtpu: 0.0.40
codegen_flags: <defaults>
</compile_context>

<pallas_src>
import jax
import jax.numpy as jnp
from jax.experimental import pallas as pl
from jax.experimental.pallas import tpu as pltpu

_LANE = 128
_MIN_TILE = 1024            # lanes per tile quantum -> tb//128 rows is a multiple of 8 (sublane-dense)
_TB_MAX = 512 * 1024        # lanes per grid step -> ~12 MiB of double-buffered VMEM with dense layout
_MIN_PALLAS_BATCH = 1024    # below this, per-call overhead dominates; use plain XLA


def _round_up(x, m):
    return ((x + m - 1) // m) * m


def basecls_kernel(x_ref, p_ref, o_ref):
    """One lane/sublane-dense batch tile.

    x_ref: (2, R, 128) f32 VMEM  - feature-major batch tile (R = tb // 128 rows)
    p_ref: (3,)        f32 SMEM  - [-w0_eff, -w1_eff, -b_eff] (sign pre-folded)
    o_ref: (R, 128)    f32 VMEM  - sigmoid output tile
    """
    # z = -(w0*x0 + w1*x1 + b); sigmoid(y) = 1 / (1 + exp(-y)) = 1 / (1 + exp(z)).
    z = x_ref[0] * p_ref[0] + x_ref[1] * p_ref[1] + p_ref[2]
    # exp goes to the EUP slot; reciprocal kept exact (approx would risk the 1e-5 tolerance).
    o_ref[...] = pl.reciprocal(1.0 + jnp.exp(z))


def basecls_forward(x, w1, b1, w3, b3, *, tb_max=_TB_MAX,
                    min_pallas_batch=_MIN_PALLAS_BATCH):
    """x: (B, 2) f32 -> (B, 1) f32. Same math as sigmoid((x @ w1 + b1) @ w3 + b3)."""
    B = x.shape[0]

    # Algebraic fusion of the two Linears (exact math reassociation; no activation between).
    w_eff = (w1 @ w3).astype(jnp.float32)          # (2, 1)
    b_eff = (b1 @ w3 + b3).astype(jnp.float32)     # (1, 1)

    # Tiny batches: the fixed pallas_call overhead dominates, plain XLA is strictly better.
    if B < min_pallas_batch:
        return jax.nn.sigmoid(x @ w_eff + b_eff)

    # Fold the sigmoid negation into the fused constants (one less VPU op per vreg).
    params = jnp.concatenate([-w_eff[:, 0], -b_eff[0]]).astype(jnp.float32)   # (3,)

    # Adaptive tile: >=2 grid steps (so both v7x TensorCores work), each step <= tb_max
    # lanes (VMEM budget), padding waste bounded to < one _MIN_TILE per step.
    tb_max = max(_MIN_TILE, _round_up(tb_max, _MIN_TILE))
    b_lanes = _round_up(B, _MIN_TILE)
    steps = max(2, pl.cdiv(b_lanes, tb_max))
    tb = _round_up(pl.cdiv(b_lanes, steps), _MIN_TILE)
    Bp = tb * steps
    rows_per_tile = tb // _LANE

    # Feature-major, fully dense layout: sample s lives at (row, lane) = (s // 128, s % 128).
    x_t = jnp.pad(x.T, ((0, 0), (0, Bp - B))).reshape(2, Bp // _LANE, _LANE)

    out = pl.pallas_call(
        basecls_kernel,
        out_shape=jax.ShapeDtypeStruct((Bp // _LANE, _LANE), jnp.float32),
        grid=(steps,),
        in_specs=[
            pl.BlockSpec((2, rows_per_tile, _LANE), lambda i: (0, i, 0)),   # streamed batch tile
            pl.BlockSpec(memory_space=pltpu.MemorySpace.SMEM),              # fused scalars
        ],
        out_specs=pl.BlockSpec((rows_per_tile, _LANE), lambda i: (i, 0)),
        compiler_params=pltpu.CompilerParams(
            dimension_semantics=("parallel",),        # independent batch tiles; megacore on v7x
            vmem_limit_bytes=32 * 1024 * 1024,        # double buffers <= ~12 MiB at tb = 512K lanes
        ),
    )(x_t, params)

    return out.reshape(Bp)[:B].reshape(B, 1)


def init_params(key):
    """Deterministic init mimicking PyTorch nn.Linear default (uniform +-1/sqrt(fan_in)).

    Weights stored pre-transposed as (in_features, out_features) == W.T so y = x @ W + b.
    """
    k1, k2, k3, k4 = jax.random.split(key, 4)
    in1, out1 = 2, 16
    in3, out3 = 16, 1
    bound1 = 1.0 / jnp.sqrt(in1)
    bound3 = 1.0 / jnp.sqrt(in3)
    w1 = jax.random.uniform(k1, (in1, out1), jnp.float32, -bound1, bound1)
    b1 = jax.random.uniform(k2, (1, out1), jnp.float32, -bound1, bound1)
    w3 = jax.random.uniform(k3, (in3, out3), jnp.float32, -bound3, bound3)
    b3 = jax.random.uniform(k4, (1, out3), jnp.float32, -bound3, bound3)
    return w1, b1, w3, b3


if __name__ == "__main__":
    key = jax.random.PRNGKey(0)
    kx, kp, kx2 = jax.random.split(key, 3)
    w1, b1, w3, b3 = init_params(kp)

    def ref_fwd(xin):
        # Reference in plain JAX: same math as the PyTorch forward (two linears + sigmoid).
        return jax.nn.sigmoid((xin @ w1 + b1) @ w3 + b3)

    # Module-sized batch: takes the small-batch XLA fallback path (overhead-dominated regime).
    batch = 8
    x = jax.random.normal(kx, (batch, 2), jnp.float32)
    out = jax.block_until_ready(basecls_forward(x, w1, b1, w3, b3))
    assert out.shape == (batch, 1)
    assert jnp.allclose(out, ref_fwd(x), atol=1e-5, rtol=1e-5)

    # Batch large enough to exercise the Pallas kernel: padding + >=2 parallel grid steps.
    batch2 = 50000
    x2 = jax.random.normal(kx2, (batch2, 2), jnp.float32)
    out2 = jax.block_until_ready(basecls_forward(x2, w1, b1, w3, b3))
    assert out2.shape == (batch2, 1)
    assert jnp.allclose(out2, ref_fwd(x2), atol=1e-5, rtol=1e-5)

    # Same batch forced through smaller tiles -> multi-step pipelined grid.
    out3 = jax.block_until_ready(basecls_forward(x2, w1, b1, w3, b3, tb_max=8192))
    assert out3.shape == (batch2, 1)
    assert jnp.allclose(out3, ref_fwd(x2), atol=1e-5, rtol=1e-5)

    print("KERNEL_OK")
</pallas_src>

<mosaic_0001>
module attributes {stable_mosaic.version = 11 : i64} {
  func.func @basecls_kernel(%arg0: i32, %arg1: memref<2x200x128xf32, #tpu.memory_space<vmem>>, %arg2: memref<3xf32, #tpu.memory_space<smem>>, %arg3: memref<200x128xf32, #tpu.memory_space<vmem>>) attributes {dimension_semantics = [#tpu.dimension_semantics<parallel>], iteration_bounds = array<i64: 2>, scalar_prefetch = 0 : i64, scratch_operands = 0 : i64, tpu.core_type = #tpu.core_type<tc>, window_params = [{transform_indices = @transform_0, window_bounds = array<i64: 2, 200, 128>}, {transform_indices = @transform_1, window_bounds = array<i64: 3>}, {transform_indices = @transform_2, window_bounds = array<i64: 200, 128>}]} {
    %c0 = arith.constant 0 : index
    %c0_0 = arith.constant 0 : index
    %c0_1 = arith.constant 0 : index
    %0 = vector.load %arg1[%c0, %c0_0, %c0_1] : memref<2x200x128xf32, #tpu.memory_space<vmem>>, vector<1x200x128xf32>
    %1 = vector.shape_cast %0 : vector<1x200x128xf32> to vector<200x128xf32>
    %c0_2 = arith.constant 0 : index
    %2 = memref.load %arg2[%c0_2] : memref<3xf32, #tpu.memory_space<smem>>
    %3 = vector.broadcast %2 : f32 to vector<200x128xf32>
    %4 = arith.mulf %1, %3 : vector<200x128xf32>
    %c1 = arith.constant 1 : index
    %c0_3 = arith.constant 0 : index
    %c0_4 = arith.constant 0 : index
    %5 = vector.load %arg1[%c1, %c0_3, %c0_4] : memref<2x200x128xf32, #tpu.memory_space<vmem>>, vector<1x200x128xf32>
    %6 = vector.shape_cast %5 : vector<1x200x128xf32> to vector<200x128xf32>
    %c1_5 = arith.constant 1 : index
    %7 = memref.load %arg2[%c1_5] : memref<3xf32, #tpu.memory_space<smem>>
    %8 = vector.broadcast %7 : f32 to vector<200x128xf32>
    %9 = arith.mulf %6, %8 : vector<200x128xf32>
    %10 = arith.addf %4, %9 : vector<200x128xf32>
    %c2 = arith.constant 2 : index
    %11 = memref.load %arg2[%c2] : memref<3xf32, #tpu.memory_space<smem>>
    %12 = vector.broadcast %11 : f32 to vector<200x128xf32>
    %13 = arith.addf %10, %12 : vector<200x128xf32>
    %14 = math.exp %13 : vector<200x128xf32>
    %cst = arith.constant 1.000000e+00 : f32
    %15 = vector.broadcast %cst : f32 to vector<200x128xf32>
    %16 = arith.addf %15, %14 : vector<200x128xf32>
    %17 = tpu.reciprocal %16 : vector<200x128xf32> -> vector<200x128xf32>
    %c0_6 = arith.constant 0 : index
    %c0_7 = arith.constant 0 : index
    %18 = vector.load %arg3[%c0_6, %c0_7] : memref<200x128xf32, #tpu.memory_space<vmem>>, vector<200x128xf32>
    tpu.vector_store %arg3[%c0_6, %c0_7], %17 {strides = array<i32>} : memref<200x128xf32, #tpu.memory_space<vmem>>, vector<200x128xf32>,
    return
  }
  func.func @transform_0(%arg0: i32) -> (i32, i32, i32) {
    %c0_i32 = arith.constant 0 : i32
    %c0_i32_0 = arith.constant 0 : i32
    %c0_i32_1 = arith.constant 0 : i32
    return %c0_i32, %arg0, %c0_i32_0 : i32, i32, i32
  }
  func.func @transform_1(%arg0: i32) -> i32 {
    %c0_i32 = arith.constant 0 : i32
    %c0_i32_0 = arith.constant 0 : i32
    return %c0_i32 : i32
  }
  func.func @transform_2(%arg0: i32) -> (i32, i32) {
    %c0_i32 = arith.constant 0 : i32
    %c0_i32_0 = arith.constant 0 : i32
    return %arg0, %c0_i32 : i32, i32
  }
}

</mosaic_0001>

<llo_original>
// kernel: tpu_custom_call.1
$region0: #{tpu_custom_call.1}
  #allocation0 [shape = 'u32[]', space=smem, size = 0x4, offset = 0x4, fixed_abs, tag = 'smem constant byte address 0x4 - core index']
  #allocation1 [shape = 'u32[144,128]{1,0:T(1,128)}', space=vmem, size = 0x12000, scoped, tag = 'internal scratch']
  #allocation8 [shape = 's32[]', space=sflag, size = 0x4, offset = 0, fixed_abs, tag = 'sflag constant byte address 0x0 - dummy sync flag']
  %s0 = inlined_call_operand.hbm [shape: f32[2,400,128], index: 0, kind: input, shape index: {}]
  %s1 = inlined_call_operand.vmem [shape: f32[3], index: 1, kind: input, shape index: {}]
  %s2 = inlined_call_operand.hbm [shape: f32[400,128], index: 2, kind: output, shape index: {}]
  %s3 = sld [smem:[#allocation0]]
  $region49: #{tpu_custom_call.1} parent=0
    _
  %s5 = ssub.s32 1, %s3
  %s6 = scalar_select 0, %s5, %s3
  $region1: #{tpu_custom_call.1} parent=0
    #allocation2 [shape = 'u8[409600]{0}', space=vmem, size = 0x64000, scoped, tag = 'input window, operand 0']
    #allocation3 [shape = 's32[2]{0}', space=sflag, size = 0x8, scoped, tag = 'scoped memory for tpu_custom_call.1']
    #allocation4 [shape = 's32[2]{0}', space=sflag, size = 0x8, scoped, tag = 'scoped memory for tpu_custom_call.1']
    #allocation5 [shape = 's32[2]{0}', space=sflag, size = 0x8, scoped, tag = 'scoped memory for tpu_custom_call.1']
    #allocation6 [shape = 'u8[512]{0}', space=smem, size = 0x200, scoped, tag = 'input window, operand 1, single buffered']
    #allocation7 [shape = 'u8[204800]{0}', space=vmem, size = 0x32000, scoped, tag = 'output window, operand 0']
    %7 = vsyncpa [#allocation3], 0
    %s8 = scalar_lea.sflag [#allocation3], 1
    %9 = vsyncpa %s8, 0
    %10 = vsyncpa [#allocation5], 0
    %11 = vsyncpa [#allocation4], 0
    %s12 = scalar_lea.sflag [#allocation4], 1
    %13 = vsyncpa %s12, 0
    loop: start=0, step=1, limit=4
    $region2: #{tpu_custom_call.1} parent=1 // loop_pre_header
      _
    $region3: #{tpu_custom_call.1} parent=1 // loop_header
      %s15 = sphi 0, %s19
      %p16 = scmp.ge.s32.totalorder %s15, 4
      %s25 = sphi 0, %s27
      %s28 = sphi 0, %s25
      %s29 = sphi 0, %s28
      %s45 = sphi 0, %s29
      %s49 = sphi 0, %s49
      %s51 = sphi 0, %s49
      %s52 = sphi 0, %s51
      %s66 = sphi 0, %s52
      %s72 = sphi 0, %s74
      %s75 = sphi 0, %s72
      %s76 = sphi 0, %s75
      %s92 = sphi 0, %s76
    $region4: #{tpu_custom_call.1} parent=1 // loop_header_branch
      %18 = sbr.rel (%p16) target = $region8
    $region5: #{tpu_custom_call.1} parent=1 // loop_body
      %s20 = ssub.s32 %s15, 1
      %s21 = ssub.s32 %s15, 2
      %s22 = sadd.s32 %s15, 1
      %s23 = ssub.s32 %s15, %s22
      %p24 = scmp.eq.s32.totalorder %s23, 0
      %s26 = sadd.s32 %s25, 1
      %s27 = scalar_select %p24, %s25, %s26
      %p30 = pneg %p24
      %p31 = scmp.eq.s32.totalorder %s15, 1
      %p32 = por %p30, %p31
      %p33 = scmp.ne.s32.totalorder %s25, %s28
      %p34 = scmp.eq.s32.totalorder %s15, 0
      %p35 = por %p33, %p34
      %p36 = scmp.ne.s32.totalorder %s25, %s28
      %p37 = scmp.eq.s32.totalorder %s20, 1
      %p38 = por %p36, %p37
      %p39 = scmp.ne.s32.totalorder %s28, %s29
      %p40 = scmp.eq.s32.totalorder %s20, 0
      %p41 = por %p39, %p40
      %p42 = scmp.ne.s32.totalorder %s28, %s29
      %p43 = scmp.eq.s32.totalorder %s21, 1
      %p44 = por %p42, %p43
      %p46 = scmp.ne.s32.totalorder %s29, %s45
      %p47 = scmp.eq.s32.totalorder %s21, 0
      %p48 = por %p46, %p47
      %s50 = sadd.s32 %s49, 1
      %p53 = scmp.eq.s32.totalorder %s15, 1
      %p54 = scmp.ne.s32.totalorder %s49, %s51
      %p55 = scmp.eq.s32.totalorder %s15, 0
      %p56 = por %p54, %p55
      %p57 = scmp.ne.s32.totalorder %s49, %s51
      %p58 = scmp.eq.s32.totalorder %s20, 1
      %p59 = por %p57, %p58
      %p60 = scmp.ne.s32.totalorder %s51, %s52
      %p61 = scmp.eq.s32.totalorder %s20, 0
      %p62 = por %p60, %p61
      %p63 = scmp.ne.s32.totalorder %s51, %s52
      %p64 = scmp.eq.s32.totalorder %s21, 1
      %p65 = por %p63, %p64
      %p67 = scmp.ne.s32.totalorder %s52, %s66
      %p68 = scmp.eq.s32.totalorder %s21, 0
      %p69 = por %p67, %p68
      %s70 = ssub.s32 %s15, %s22
      %p71 = scmp.eq.s32.totalorder %s70, 0
      %s73 = sadd.s32 %s72, 1
      %s74 = scalar_select %p71, %s72, %s73
      %p77 = pneg %p71
      %p78 = scmp.eq.s32.totalorder %s15, 1
      %p79 = por %p77, %p78
      %p80 = scmp.ne.s32.totalorder %s72, %s75
      %p81 = scmp.eq.s32.totalorder %s15, 0
      %p82 = por %p80, %p81
      %p83 = scmp.ne.s32.totalorder %s72, %s75
      %p84 = scmp.eq.s32.totalorder %s20, 1
      %p85 = por %p83, %p84
      %p86 = scmp.ne.s32.totalorder %s75, %s76
      %p87 = scmp.eq.s32.totalorder %s20, 0
      %p88 = por %p86, %p87
      %p89 = scmp.ne.s32.totalorder %s75, %s76
      %p90 = scmp.eq.s32.totalorder %s21, 1
      %p91 = por %p89, %p90
      %p93 = scmp.ne.s32.totalorder %s76, %s92
      %p94 = scmp.eq.s32.totalorder %s21, 0
      %p95 = por %p93, %p94
      %p96 = scmp.le.s32.totalorder 1, %s15
      %p97 = scmp.lt.s32.totalorder %s15, 3
      %p98 = pnand %p96, %p97
      %p99 = pneg %p98
      // Predicated region
      $region9: #{tpu_custom_call.1} parent=5 // pred_check
        _
      $region10: #{tpu_custom_call.1} parent=5 // pred_check_branch
        %101 = sbr.rel (%p98) target = $region12
      $region11: #{tpu_custom_call.1} parent=5 // pred_region
        %s102 = ssub.s32 %s15, 1
        // Predicated region
        $region13: #{tpu_custom_call.1} parent=11 // pred_check
          %p103 = pneg %p62
        $region14: #{tpu_custom_call.1} parent=11 // pred_check_branch
          %105 = sbr.rel (%p103) target = $region16
        $region15: #{tpu_custom_call.1} parent=11 // pred_region
          %s107 = ssub.s32 16, 16
          %108 = vsyncadd [#allocation5], %s107
          %s110 = sshll.u32 %s1, 4
          %s111 = int_to_ptr.vmem [resolvable:$true] %s110
          %113 = dma.vmem_to_smem %s111, 16, [#allocation6], [#allocation5]
        $region16: #{tpu_custom_call.1} parent=11 // pred_fallthru
          _
      $region12: #{tpu_custom_call.1} parent=5 // pred_fallthru
        _
      %p114 = scmp.lt.s32.totalorder %s15, 2
      // Predicated region
      $region17: #{tpu_custom_call.1} parent=5 // pred_check
        %p115 = pneg %p114
      $region18: #{tpu_custom_call.1} parent=5 // pred_check_branch
        %117 = sbr.rel (%p115) target = $region20
      $region19: #{tpu_custom_call.1} parent=5 // pred_region
        // Predicated region
        $region21: #{tpu_custom_call.1} parent=19 // pred_check
          %p118 = pneg %p35
        $region22: #{tpu_custom_call.1} parent=19 // pred_check_branch
          %120 = sbr.rel (%p118) target = $region24
        $region23: #{tpu_custom_call.1} parent=19 // pred_region
          #allocation9 [shape = 'u32[6]{0}', space=smem, size = 0x18, scoped, tag = 'DMA stride descriptor']
          %s121 = sand.u32 %s25, 1
          %s122 = scalar_lea.sflag [#allocation3], %s121
          %s123 = sand.u32 %s25, 1
          %s124 = smul.addr %s123, 400
          %s125 = scalar_lea.vmem [#allocation2], %s124
          %s126 = smul.u32 25, %s15
          %s128 = ssub.s32 6400, 6400
          %129 = vsyncadd %s122, %s128
          %s130 = smul.addr %s126, 128
          %s131 = scalar_lea.hbm %s0, %s130
          %s133 = sshll.u32 1, 14
          %s134 = sxor.u32 4294967295, %s133
          %s136 = sld [smem:[#allocation0]]
          %s137 = sadd.s32 2, %s136
          %s139 = sshll.u32 7, 26
          %s140 = sxor.u32 4294967295, %s139
          %s141 = sand.u32 0, %s140
          %s142 = sshll.u32 %s137, 26
          %s143 = sor.u32 %s141, %s142
          %s144 = sshll.u32 %s125, 4
          %s145 = int_to_ptr.vmem [resolvable:$true] %s144
          %151 = sst [smem:[#allocation9]] 6400
          %s152 = scalar_lea.smem [#allocation9], 1
          %153 = sst [smem:[%s152]] 3200
          %s154 = scalar_lea.smem [#allocation9], 2
          %155 = sst [smem:[%s154]] 25
          %s156 = scalar_lea.smem [#allocation9], 3
          %157 = sst [smem:[%s156]] 128
          %s158 = scalar_lea.smem [#allocation9], 4
          %159 = sst [smem:[%s158]] 128
          %s160 = scalar_lea.smem [#allocation9], 5
          %161 = sst [smem:[%s160]] 8
          %163 = dma.general %s131, 6400, %s145, %s122, [#allocation8], [#allocation9], %s143, 0
        $region24: #{tpu_custom_call.1} parent=19 // pred_fallthru
          _
      $region20: #{tpu_custom_call.1} parent=5 // pred_fallthru
        _
      %p164 = scmp.le.s32.totalorder 1, %s15
      %p165 = scmp.lt.s32.totalorder %s15, 3
      %p166 = pnand %p164, %p165
      %p167 = pneg %p166
      // Predicated region
      $region25: #{tpu_custom_call.1} parent=5 // pred_check
        _
      $region26: #{tpu_custom_call.1} parent=5 // pred_check_branch
        %169 = sbr.rel (%p166) target = $region28
      $region27: #{tpu_custom_call.1} parent=5 // pred_region
        %s170 = ssub.s32 %s15, 1
        %s171 = sand.u32 %s28, 1
        %s172 = scalar_lea.sflag [#allocation3], %s171
        %s173 = sand.u32 %s28, 1
        %s174 = smul.addr %s173, 400
        %s175 = scalar_lea.vmem [#allocation2], %s174
        // Predicated region
        $region29: #{tpu_custom_call.1} parent=27 // pred_check
          %p176 = pneg %p41
        $region30: #{tpu_custom_call.1} parent=27 // pred_check_branch
          %178 = sbr.rel (%p176) target = $region32
        $region31: #{tpu_custom_call.1} parent=27 // pred_region
          %179 = dma.done %s172, 6400
        $region32: #{tpu_custom_call.1} parent=27 // pred_fallthru
          _
        // Predicated region
        $region33: #{tpu_custom_call.1} parent=27 // pred_check
          %p180 = pneg %p62
        $region34: #{tpu_custom_call.1} parent=27 // pred_check_branch
          %182 = sbr.rel (%p180) target = $region36
        $region35: #{tpu_custom_call.1} parent=27 // pred_region
          %183 = dma.done [#allocation5], 16
        $region36: #{tpu_custom_call.1} parent=27 // pred_fallthru
          _
        %184 = sfence
        %s185 = sand.u32 %s28, 1
        %s186 = scalar_lea.sflag [#allocation3], %s185
        %s187 = sand.u32 %s28, 1
        %s188 = smul.addr %s187, 400
        %s189 = scalar_lea.vmem [#allocation2], %s188
        %p190 = pneg %p41
        %p191 = pneg %p38
        %p192 = pneg %p62
        %p193 = pneg %p59
        %p194 = pneg %p88
        %p195 = pneg %p85
        %s196 = sand.u32 %s75, 1
        %s197 = scalar_lea.sflag [#allocation4], %s196
        %s198 = sand.u32 %s75, 1
        %s199 = smul.addr %s198, 200
        %s200 = scalar_lea.vmem [#allocation7], %s199
        %s201 = smul.u32 25, %s20
        %s202 = smul.u32 25, %s20
        %v203 = vld [vmem:[%s175] sm:$0xff]
        %v204 = vld [vmem:[%s175 + $0x8] sm:$0xff]
        %v205 = vld [vmem:[%s175 + $0x10] sm:$0xff]
        %v206 = vld [vmem:[%s175 + $0x18] sm:$0xff]
        %v207 = vld [vmem:[%s175 + $0x20] sm:$0xff]
        %v208 = vld [vmem:[%s175 + $0x28] sm:$0xff]
        %v209 = vld [vmem:[%s175 + $0x30] sm:$0xff]
        %v210 = vld [vmem:[%s175 + $0x38] sm:$0xff]
        %v211 = vld [vmem:[%s175 + $0x40] sm:$0xff]
        %v212 = vld [vmem:[%s175 + $0x48] sm:$0xff]
        %v213 = vld [vmem:[%s175 + $0x50] sm:$0xff]
        %v214 = vld [vmem:[%s175 + $0x58] sm:$0xff]
        %v215 = vld [vmem:[%s175 + $0x60] sm:$0xff]
        %v216 = vld [vmem:[%s175 + $0x68] sm:$0xff]
        %v217 = vld [vmem:[%s175 + $0x70] sm:$0xff]
        %v218 = vld [vmem:[%s175 + $0x78] sm:$0xff]
        %v219 = vld [vmem:[%s175 + $0x80] sm:$0xff]
        %v220 = vld [vmem:[%s175 + $0x88] sm:$0xff]
        %v221 = vld [vmem:[%s175 + $0x90] sm:$0xff]
        %v222 = vld [vmem:[%s175 + $0x98] sm:$0xff]
        %v223 = vld [vmem:[%s175 + $0xa0] sm:$0xff]
        %v224 = vld [vmem:[%s175 + $0xa8] sm:$0xff]
        %v225 = vld [vmem:[%s175 + $0xb0] sm:$0xff]
        %v226 = vld [vmem:[%s175 + $0xb8] sm:$0xff]
        %v227 = vld [vmem:[%s175 + $0xc0] sm:$0xff]
        %s228 = sld [smem:[#allocation6]]
        %v229 = vstv %s228
        %v230 = vmul.f32 %v203, %v229
        %v231 = vmul.f32 %v204, %v229
        %v232 = vmul.f32 %v205, %v229
        %v233 = vmul.f32 %v206, %v229
        %v234 = vmul.f32 %v207, %v229
        %v235 = vmul.f32 %v208, %v229
        %v236 = vmul.f32 %v209, %v229
        %v237 = vmul.f32 %v210, %v229
        %v238 = vmul.f32 %v211, %v229
        %v239 = vmul.f32 %v212, %v229
        %v240 = vmul.f32 %v213, %v229
        %v241 = vmul.f32 %v214, %v229
        %v242 = vmul.f32 %v215, %v229
        %v243 = vmul.f32 %v216, %v229
        %v244 = vmul.f32 %v217, %v229
        %v245 = vmul.f32 %v218, %v229
        %v246 = vmul.f32 %v219, %v229
        %v247 = vmul.f32 %v220, %v229
        %v248 = vmul.f32 %v221, %v229
        %v249 = vmul.f32 %v222, %v229
        %v250 = vmul.f32 %v223, %v229
        %v251 = vmul.f32 %v224, %v229
        %v252 = vmul.f32 %v225, %v229
        %v253 = vmul.f32 %v226, %v229
        %v254 = vmul.f32 %v227, %v229
        %s255 = scalar_lea.vmem %s175, 200 [#allocation2]
        %v256 = vld [vmem:[%s255] sm:$0xff]
        %v257 = vld [vmem:[%s255 + $0x8] sm:$0xff]
        %v258 = vld [vmem:[%s255 + $0x10] sm:$0xff]
        %v259 = vld [vmem:[%s255 + $0x18] sm:$0xff]
        %v260 = vld [vmem:[%s255 + $0x20] sm:$0xff]
        %v261 = vld [vmem:[%s255 + $0x28] sm:$0xff]
        %v262 = vld [vmem:[%s255 + $0x30] sm:$0xff]
        %v263 = vld [vmem:[%s255 + $0x38] sm:$0xff]
        %v264 = vld [vmem:[%s255 + $0x40] sm:$0xff]
        %v265 = vld [vmem:[%s255 + $0x48] sm:$0xff]
        %v266 = vld [vmem:[%s255 + $0x50] sm:$0xff]
        %v267 = vld [vmem:[%s255 + $0x58] sm:$0xff]
        %v268 = vld [vmem:[%s255 + $0x60] sm:$0xff]
        %v269 = vld [vmem:[%s255 + $0x68] sm:$0xff]
        %v270 = vld [vmem:[%s255 + $0x70] sm:$0xff]
        %v271 = vld [vmem:[%s255 + $0x78] sm:$0xff]
        %v272 = vld [vmem:[%s255 + $0x80] sm:$0xff]
        %v273 = vld [vmem:[%s255 + $0x88] sm:$0xff]
        %v274 = vld [vmem:[%s255 + $0x90] sm:$0xff]
        %v275 = vld [vmem:[%s255 + $0x98] sm:$0xff]
        %v276 = vld [vmem:[%s255 + $0xa0] sm:$0xff]
        %v277 = vld [vmem:[%s255 + $0xa8] sm:$0xff]
        %v278 = vld [vmem:[%s255 + $0xb0] sm:$0xff]
        %v279 = vld [vmem:[%s255 + $0xb8] sm:$0xff]
        %v280 = vld [vmem:[%s255 + $0xc0] sm:$0xff]
        %s281 = sld [smem:[#allocation6 + $0x1]]
        %v282 = vstv %s281
        %v283 = vmul.f32 %v256, %v282
        %v284 = vmul.f32 %v257, %v282
        %v285 = vmul.f32 %v258, %v282
        %v286 = vmul.f32 %v259, %v282
        %v287 = vmul.f32 %v260, %v282
        %v288 = vmul.f32 %v261, %v282
        %v289 = vmul.f32 %v262, %v282
        %v290 = vmul.f32 %v263, %v282
        %v291 = vmul.f32 %v264, %v282
        %v292 = vmul.f32 %v265, %v282
        %v293 = vmul.f32 %v266, %v282
        %v294 = vmul.f32 %v267, %v282
        %v295 = vmul.f32 %v268, %v282
        %v296 = vmul.f32 %v269, %v282
        %v297 = vmul.f32 %v270, %v282
        %v298 = vmul.f32 %v271, %v282
        %v299 = vmul.f32 %v272, %v282
        %v300 = vmul.f32 %v273, %v282
        %v301 = vmul.f32 %v274, %v282
        %v302 = vmul.f32 %v275, %v282
        %v303 = vmul.f32 %v276, %v282
        %v304 = vmul.f32 %v277, %v282
        %v305 = vmul.f32 %v278, %v282
        %v306 = vmul.f32 %v279, %v282
        %v307 = vmul.f32 %v280, %v282
        %v308 = vadd.f32 %v230, %v283
        %v309 = vadd.f32 %v231, %v284
        %v310 = vadd.f32 %v232, %v285
        %v311 = vadd.f32 %v233, %v286
        %v312 = vadd.f32 %v234, %v287
        %v313 = vadd.f32 %v235, %v288
        %v314 = vadd.f32 %v236, %v289
        %v315 = vadd.f32 %v237, %v290
        %v316 = vadd.f32 %v238, %v291
        %v317 = vadd.f32 %v239, %v292
        %v318 = vadd.f32 %v240, %v293
        %v319 = vadd.f32 %v241, %v294
        %v320 = vadd.f32 %v242, %v295
        %v321 = vadd.f32 %v243, %v296
        %v322 = vadd.f32 %v244, %v297
        %v323 = vadd.f32 %v245, %v298
        %v324 = vadd.f32 %v246, %v299
        %v325 = vadd.f32 %v247, %v300
        %v326 = vadd.f32 %v248, %v301
        %v327 = vadd.f32 %v249, %v302
        %v328 = vadd.f32 %v250, %v303
        %v329 = vadd.f32 %v251, %v304
        %v330 = vadd.f32 %v252, %v305
        %v331 = vadd.f32 %v253, %v306
        %v332 = vadd.f32 %v254, %v307
        %s333 = sld [smem:[#allocation6 + $0x2]]
        %v334 = vstv %s333
        %v335 = vadd.f32 %v308, %v334
        %v336 = vadd.f32 %v309, %v334
        %v337 = vadd.f32 %v310, %v334
        %v338 = vadd.f32 %v311, %v334
        %v339 = vadd.f32 %v312, %v334
        %v340 = vadd.f32 %v313, %v334
        %v341 = vadd.f32 %v314, %v334
        %v342 = vadd.f32 %v315, %v334
        %v343 = vadd.f32 %v316, %v334
        %v344 = vadd.f32 %v317, %v334
        %v345 = vadd.f32 %v318, %v334
        %v346 = vadd.f32 %v319, %v334
        %v347 = vadd.f32 %v320, %v334
        %v348 = vadd.f32 %v321, %v334
        %v349 = vadd.f32 %v322, %v334
        %v350 = vadd.f32 %v323, %v334
        %v351 = vadd.f32 %v324, %v334
        %v352 = vadd.f32 %v325, %v334
        %v353 = vadd.f32 %v326, %v334
        %v354 = vadd.f32 %v327, %v334
        %v355 = vadd.f32 %v328, %v334
        %v356 = vadd.f32 %v329, %v334
        %v357 = vadd.f32 %v330, %v334
        %v358 = vadd.f32 %v331, %v334
        %v359 = vadd.f32 %v332, %v334
        %v360 = vmul.f32 %v335, 1.442695
        %v361 = vpow.pop %v360
        %v362 = vmul.f32 %v336, 1.442695
        %v363 = vpow.pop %v362
        %v364 = vmul.f32 %v337, 1.442695
        %v365 = vpow.pop %v364
        %v366 = vmul.f32 %v338, 1.442695
        %v367 = vpow.pop %v366
        %v368 = vmul.f32 %v339, 1.442695
        %v369 = vpow.pop %v368
        %v370 = vmul.f32 %v340, 1.442695
        %v371 = vpow.pop %v370
        %v372 = vmul.f32 %v341, 1.442695
        %v373 = vpow.pop %v372
        %v374 = vmul.f32 %v342, 1.442695
        %v375 = vpow.pop %v374
        %v376 = vmul.f32 %v343, 1.442695
        %v377 = vpow.pop %v376
        %v378 = vmul.f32 %v344, 1.442695
        %v379 = vpow.pop %v378
        %v380 = vmul.f32 %v345, 1.442695
        %v381 = vpow.pop %v380
        %v382 = vmul.f32 %v346, 1.442695
        %v383 = vpow.pop %v382
        %v384 = vmul.f32 %v347, 1.442695
        %v385 = vpow.pop %v384
        %v386 = vmul.f32 %v348, 1.442695
        %v387 = vpow.pop %v386
        %v388 = vmul.f32 %v349, 1.442695
        %v389 = vpow.pop %v388
        %v390 = vmul.f32 %v350, 1.442695
        %v391 = vpow.pop %v390
        %v392 = vmul.f32 %v351, 1.442695
        %v393 = vpow.pop %v392
        %v394 = vmul.f32 %v352, 1.442695
        %v395 = vpow.pop %v394
        %v396 = vmul.f32 %v353, 1.442695
        %v397 = vpow.pop %v396
        %v398 = vmul.f32 %v354, 1.442695
        %v399 = vpow.pop %v398
        %v400 = vmul.f32 %v355, 1.442695
        %v401 = vpow.pop %v400
        %v402 = vmul.f32 %v356, 1.442695
        %v403 = vpow.pop %v402
        %v404 = vmul.f32 %v357, 1.442695
        %v405 = vpow.pop %v404
        %v406 = vmul.f32 %v358, 1.442695
        %v407 = vpow.pop %v406
        %v408 = vmul.f32 %v359, 1.442695
        %v409 = vpow.pop %v408
        %v410 = vadd.f32 %v361, 1.0
        %v411 = vadd.f32 %v363, 1.0
        %v412 = vadd.f32 %v365, 1.0
        %v413 = vadd.f32 %v367, 1.0
        %v414 = vadd.f32 %v369, 1.0
        %v415 = vadd.f32 %v371, 1.0
        %v416 = vadd.f32 %v373, 1.0
        %v417 = vadd.f32 %v375, 1.0
        %v418 = vadd.f32 %v377, 1.0
        %v419 = vadd.f32 %v379, 1.0
        %v420 = vadd.f32 %v381, 1.0
        %v421 = vadd.f32 %v383, 1.0
        %v422 = vadd.f32 %v385, 1.0
        %v423 = vadd.f32 %v387, 1.0
        %v424 = vadd.f32 %v389, 1.0
        %v425 = vadd.f32 %v391, 1.0
        %v426 = vadd.f32 %v393, 1.0
        %v427 = vadd.f32 %v395, 1.0
        %v428 = vadd.f32 %v397, 1.0
        %v429 = vadd.f32 %v399, 1.0
        %v430 = vadd.f32 %v401, 1.0
        %v431 = vadd.f32 %v403, 1.0
        %v432 = vadd.f32 %v405, 1.0
        %v433 = vadd.f32 %v407, 1.0
        %v434 = vadd.f32 %v409, 1.0
        %v435 = vrcp.pop %v410
        %v436 = vrcp.pop %v411
        %v437 = vrcp.pop %v412
        %v438 = vrcp.pop %v413
        %v439 = vrcp.pop %v414
        %v440 = vrcp.pop %v415
        %v441 = vrcp.pop %v416
        %v442 = vrcp.pop %v417
        %v443 = vrcp.pop %v418
        %v444 = vrcp.pop %v419
        %v445 = vrcp.pop %v420
        %v446 = vrcp.pop %v421
        %v447 = vrcp.pop %v422
        %v448 = vrcp.pop %v423
        %v449 = vrcp.pop %v424
        %v450 = vrcp.pop %v425
        %v451 = vrcp.pop %v426
        %v452 = vrcp.pop %v427
        %v453 = vrcp.pop %v428
        %v454 = vrcp.pop %v429
        %v455 = vrcp.pop %v430
        %v456 = vrcp.pop %v431
        %v457 = vrcp.pop %v432
        %v458 = vrcp.pop %v433
        %v459 = vrcp.pop %v434
        %460 = vst [vmem:[%s200] sm:$0xff] %v435
        %461 = vst [vmem:[%s200 + $0x8] sm:$0xff] %v436
        %462 = vst [vmem:[%s200 + $0x10] sm:$0xff] %v437
        %463 = vst [vmem:[%s200 + $0x18] sm:$0xff] %v438
        %464 = vst [vmem:[%s200 + $0x20] sm:$0xff] %v439
        %465 = vst [vmem:[%s200 + $0x28] sm:$0xff] %v440
        %466 = vst [vmem:[%s200 + $0x30] sm:$0xff] %v441
        %467 = vst [vmem:[%s200 + $0x38] sm:$0xff] %v442
        %468 = vst [vmem:[%s200 + $0x40] sm:$0xff] %v443
        %469 = vst [vmem:[%s200 + $0x48] sm:$0xff] %v444
        %470 = vst [vmem:[%s200 + $0x50] sm:$0xff] %v445
        %471 = vst [vmem:[%s200 + $0x58] sm:$0xff] %v446
        %472 = vst [vmem:[%s200 + $0x60] sm:$0xff] %v447
        %473 = vst [vmem:[%s200 + $0x68] sm:$0xff] %v448
        %474 = vst [vmem:[%s200 + $0x70] sm:$0xff] %v449
        %475 = vst [vmem:[%s200 + $0x78] sm:$0xff] %v450
        %476 = vst [vmem:[%s200 + $0x80] sm:$0xff] %v451
        %477 = vst [vmem:[%s200 + $0x88] sm:$0xff] %v452
        %478 = vst [vmem:[%s200 + $0x90] sm:$0xff] %v453
        %479 = vst [vmem:[%s200 + $0x98] sm:$0xff] %v454
        %480 = vst [vmem:[%s200 + $0xa0] sm:$0xff] %v455
        %481 = vst [vmem:[%s200 + $0xa8] sm:$0xff] %v456
        %482 = vst [vmem:[%s200 + $0xb0] sm:$0xff] %v457
        %483 = vst [vmem:[%s200 + $0xb8] sm:$0xff] %v458
        %484 = vst [vmem:[%s200 + $0xc0] sm:$0xff] %v459
        %s485 = sand.u32 %s75, 1
        %s486 = scalar_lea.sflag [#allocation4], %s485
        %s487 = sand.u32 %s75, 1
        %s488 = smul.addr %s487, 200
        %s489 = scalar_lea.vmem [#allocation7], %s488
        // Predicated region
        $region37: #{tpu_custom_call.1} parent=27 // pred_check
          %p490 = pneg %p85
        $region38: #{tpu_custom_call.1} parent=27 // pred_check_branch
          %492 = sbr.rel (%p490) target = $region40
        $region39: #{tpu_custom_call.1} parent=27 // pred_region
          %s493 = smul.u32 25, %s20
          %s495 = ssub.s32 3200, 3200
          %496 = vsyncadd %s486, %s495
          %s497 = smul.addr %s493, 128
          %s498 = scalar_lea.hbm %s2, %s497
          %s499 = sshll.u32 %s489, 4
          %s500 = int_to_ptr.vmem [resolvable:$true] %s499
          %505 = dma.vmem_to_hbm [thread:$0]  %s500, 3200, %s498, %s486, 128, 128, 8
        $region40: #{tpu_custom_call.1} parent=27 // pred_fallthru
          _
      $region28: #{tpu_custom_call.1} parent=5 // pred_fallthru
        _
      %p506 = scmp.le.s32.totalorder 2, %s15
      // Predicated region
      $region41: #{tpu_custom_call.1} parent=5 // pred_check
        %p507 = pneg %p506
      $region42: #{tpu_custom_call.1} parent=5 // pred_check_branch
        %509 = sbr.rel (%p507) target = $region44
      $region43: #{tpu_custom_call.1} parent=5 // pred_region
        %s510 = ssub.s32 %s15, 2
        // Predicated region
        $region45: #{tpu_custom_call.1} parent=43 // pred_check
          %p511 = pneg %p91
        $region46: #{tpu_custom_call.1} parent=43 // pred_check_branch
          %513 = sbr.rel (%p511) target = $region48
        $region47: #{tpu_custom_call.1} parent=43 // pred_region
          %s514 = sand.u32 %s76, 1
          %s515 = scalar_lea.sflag [#allocation4], %s514
          %s516 = sand.u32 %s76, 1
          %s517 = smul.addr %s516, 200
          %s518 = scalar_lea.vmem [#allocation7], %s517
          %519 = dma.done %s515, 3200
        $region48: #{tpu_custom_call.1} parent=43 // pred_fallthru
          _
      $region44: #{tpu_custom_call.1} parent=5 // pred_fallthru
        _
    $region6: #{tpu_custom_call.1} parent=1 // loop_footer
      %s19 = sadd.s32 1, %s15
    $region7: #{tpu_custom_call.1} parent=1 // loop_footer_branch
      %14 = sbr.rel target = $region3
    $region8: #{tpu_custom_call.1} parent=1 // loop_exit
      _
    %520 = vsyncpa [#allocation3], 1
    %s521 = scalar_lea.sflag [#allocation3], 1
    %522 = vsyncpa %s521, 1
    %523 = vsyncpa [#allocation4], 1
    %s524 = scalar_lea.sflag [#allocation4], 1
    %525 = vsyncpa %s524, 1
    %526 = vsyncpa [#allocation5], 1
    %s527 = scalar_lea.sflag [#allocation5], 1
    %528 = vsyncpa %s527, 1

</llo_original>
